<compile_context>
chip_gen: v7x
topology: tpu7x:2x2x1
jax: 0.10.0
libtpu: 0.0.40
codegen_flags: <defaults>
</compile_context>

<pallas_src>
import math

import jax
import jax.numpy as jnp
from jax.experimental import pallas as pl
from jax.experimental.pallas import tpu as pltpu

EMB = 32       # emb_size
N_NODE = 16    # number of items
BATCH = 8      # batch_size
SEQ = 8        # max session length
LAYERS = 2     # conv layers
BETA = 0.01    # SSL loss weight


# ------------------------------------------------------------------ fused DHCN kernel
def _make_dhcn_kernel(N, B, L, E, offs):
    """Build the fused DHCN kernel with static shape/offset constants baked in."""
    o_pos, o_w1s, o_g1w, o_g1b, o_g2w, o_w2, o_pc = offs
    LB = L * B

    def kernel(g_ref, emb_ref, p_ref, out_ref, loss_ref):
        f32 = jnp.float32

        # -- single MXU op for everything that touches the embedding table ----
        #    rows: [prop_hg | oh_rev@prop_hg | hs_w@prop_hg | m_lg | m_lg[inv_pr]]
        fused = jnp.dot(g_ref[...], emb_ref[...], preferred_element_type=f32)
        item_hg = fused[0:N]                                # (N, E)   HyperConv out
        seq2 = fused[N:N + LB]                              # (L*B, E) gathered sessions
        hs = fused[N + LB:N + LB + B]                       # (B, E)   session mean
        sess_lg = fused[N + LB + B:N + LB + 2 * B]          # (B, E)   LineConv out
        sess_lgrp = fused[N + LB + 2 * B:N + LB + 3 * B]    # (B, E)   row-shuffled LG

        # -- packed parameter slab (static, sublane-aligned slices) -----------
        p = p_ref[...]
        pos_term = p[o_pos:o_pos + L]      # (L, E)  pos_emb @ w_1[:E] (hoisted)
        w1s = p[o_w1s:o_w1s + E]           # (E, E)  w_1[E:]
        g1w = p[o_g1w:o_g1w + E]           # (E, E)  glu1.weight.T
        g1b = p[o_g1b:o_g1b + 1]           # (1, E)  glu1.bias
        g2w = p[o_g2w:o_g2w + E]           # (E, E)  glu2.weight.T
        w2row = p[o_w2:o_w2 + 1]           # (1, E)  w_2.T
        pcol = p[o_pc:o_pc + E]            # (E, E)  column permutation (SSL)

        # -- soft attention over session positions (all sessions batched) -----
        sw = jnp.dot(seq2, w1s, preferred_element_type=f32)               # (L*B, E)
        nh = jnp.tanh(sw.reshape(L, B, E) + pos_term[:, None, :])         # (L, B, E)
        g1 = jnp.dot(nh.reshape(LB, E), g1w, preferred_element_type=f32) + g1b
        g2 = jnp.dot(hs, g2w, preferred_element_type=f32)                 # (B, E)
        gate = jax.nn.sigmoid(g1.reshape(L, B, E) + g2[None, :, :])       # (L, B, E)
        # mask multiply is redundant: padded positions gathered the all-zero
        # row, so their beta * seq2 contribution is already zero (== reference).
        beta = jnp.sum(gate * w2row, axis=-1, keepdims=True)              # (L, B, 1)
        sess_hg = jnp.sum(beta * seq2.reshape(L, B, E), axis=0)           # (B, E)

        # -- packed output slab: [item_embeddings_hg ; sess_emb_hgnn] ---------
        out_ref[0:N, :] = item_hg
        out_ref[N:N + B, :] = sess_hg

        # -- SSL contrastive loss (row shuffle pre-folded into G) -------------
        shuf = jnp.dot(sess_hg, pcol, preferred_element_type=f32)         # (B, E)
        pos_s = jnp.sum(sess_hg * sess_lg, axis=1, keepdims=True)         # (B, 1)
        neg_s = jnp.sum(sess_lgrp * shuf, axis=1, keepdims=True)          # (B, 1)
        term = (-jnp.log(1e-8 + jax.nn.sigmoid(pos_s))
                - jnp.log(1e-8 + (1.0 - jax.nn.sigmoid(neg_s))))
        loss_ref[0, 0] = jnp.sum(term)                                    # scalar -> SMEM

    return kernel


def _prop_matrix(m, layers):
    # I + M + M^2 + ... + M^layers   (reference sums layer outputs, no average)
    n = m.shape[0]
    acc = jnp.eye(n, dtype=jnp.float32)
    cur = acc
    for _ in range(layers):
        cur = jnp.dot(cur, m)
        acc = acc + cur
    return acc


def _pad8(x):
    r = (-x.shape[0]) % 8
    if r == 0:
        return x
    return jnp.concatenate([x, jnp.zeros((r, x.shape[1]), x.dtype)], axis=0)


# ------------------------------------------------------------------ forward wrapper
@jax.jit
def dhcn_forward(params, adjacency, session_item, session_len, D, A,
                 reversed_sess_item, mask, perm_row, perm_col):
    del mask  # redundant: padded item index 0 -> all-zero gather row (see kernel)
    f32 = jnp.float32
    N, E = params["embedding"].shape
    B, L = session_item.shape

    # -------- tiny index / propagation glue (fused by XLA under jit) ---------
    prop_hg = _prop_matrix(adjacency, LAYERS)                           # (N, N)
    prop_lg = _prop_matrix(jnp.dot(D, A), LAYERS)                       # (B, B)

    # one-hot gather matrices (item index 0 == padding -> all-zero row)
    rev_t = jnp.transpose(reversed_sess_item).reshape(L * B)            # row l*B+b
    oh_rev_t = jax.nn.one_hot(rev_t - 1, N, dtype=f32)                  # (L*B, N)

    inv_len = 1.0 / session_len                                         # (B, 1)
    hs_w = jax.nn.one_hot(reversed_sess_item - 1, N, dtype=f32).sum(axis=1) * inv_len  # (B, N)
    lg_w = jax.nn.one_hot(session_item - 1, N, dtype=f32).sum(axis=1) * inv_len        # (B, N)
    m_lg = jnp.dot(prop_lg, lg_w)                                       # (B, N)
    inv_pr = jnp.argsort(perm_row)                                      # inverse row perm
    m_lg_rp = m_lg[inv_pr]                                              # (B, N)

    # everything that multiplies the embedding table, stacked -> ONE kernel matmul
    G = jnp.concatenate([
        prop_hg,                        # -> item_embeddings_hg
        jnp.dot(oh_rev_t, prop_hg),     # -> seq2 (reversed-session gather of item_hg)
        jnp.dot(hs_w, prop_hg),         # -> hs   (per-session mean of item_hg)
        m_lg,                           # -> sess_emb_lg (LineConv, layers folded)
        m_lg_rp,                        # -> row-shuffled sess_emb_lg for SSL neg
    ], axis=0)                                                          # (N+L*B+3B, N)

    # packed (·, E) parameter slab, segments padded to 8-sublane boundaries
    w1_pos, w1_seq = params["w_1"][:E], params["w_1"][E:]               # (E, E) each
    pos_term = jnp.dot(params["pos_embedding"][:L], w1_pos)             # (L, E), hoisted
    glu1_wT = params["glu1_w"].T                                        # torch Linear: x @ W.T
    glu1_b = params["glu1_b"].reshape(1, E)
    glu2_wT = params["glu2_w"].T
    w2_row = params["w_2"].T                                            # (1, E)
    pcol = jnp.eye(E, dtype=f32)[perm_col].T                            # (E, E) col shuffle

    segs = [pos_term, w1_seq, glu1_wT, glu1_b, glu2_wT, w2_row, pcol]
    padded, offs, off = [], [], 0
    for s in segs:
        sp = _pad8(s)
        padded.append(sp)
        offs.append(off)
        off += sp.shape[0]
    P = jnp.concatenate(padded, axis=0)                                 # (152, E)

    kernel = _make_dhcn_kernel(N, B, L, E, tuple(offs))
    vmem = pl.BlockSpec(memory_space=pltpu.MemorySpace.VMEM)
    out_slab, loss = pl.pallas_call(
        kernel,
        out_shape=(
            jax.ShapeDtypeStruct((N + B, E), f32),   # [item_embeddings_hg ; sess_emb_hgnn]
            jax.ShapeDtypeStruct((1, 1), f32),       # con_loss (scalar, SMEM)
        ),
        in_specs=[vmem, vmem, vmem],
        out_specs=(vmem, pl.BlockSpec(memory_space=pltpu.MemorySpace.SMEM)),
        compiler_params=pltpu.CompilerParams(vmem_limit_bytes=32 * 1024 * 1024),
    )(G, params["embedding"], P)

    item_hg = out_slab[:N]
    sess_hg = out_slab[N:]
    return item_hg, sess_hg, BETA * loss[0, 0]


if __name__ == "__main__":
    key = jax.random.PRNGKey(0)
    keys = jax.random.split(key, 16)
    stdv = 1.0 / math.sqrt(EMB)
    u = lambda k, shape: jax.random.uniform(k, shape, jnp.float32, -stdv, stdv)

    # deterministic parameters (all uniform(-stdv, stdv) as in DHCN.init_parameters)
    params = {
        "embedding": u(keys[0], (N_NODE, EMB)),
        "pos_embedding": u(keys[1], (200, EMB)),
        "w_1": u(keys[2], (2 * EMB, EMB)),
        "w_2": u(keys[3], (EMB, 1)),
        "glu1_w": u(keys[4], (EMB, EMB)),   # nn.Linear weight (out, in)
        "glu1_b": u(keys[5], (EMB,)),
        "glu2_w": u(keys[6], (EMB, EMB)),   # nn.Linear (bias=False)
    }

    # synthetic dense stand-in for the scipy COO hypergraph adjacency
    adjacency = jax.random.uniform(keys[7], (N_NODE, N_NODE), jnp.float32) / N_NODE

    mask = (jax.random.uniform(keys[8], (BATCH, SEQ)) > 0.3).astype(jnp.int32)
    mask = mask.at[:, 0].set(1)
    session_item = jax.random.randint(keys[9], (BATCH, SEQ), 1, N_NODE + 1) * mask
    reversed_sess_item = jnp.flip(session_item, axis=1)
    session_len = jnp.sum(mask, axis=1, keepdims=True).astype(jnp.float32)
    D = jax.random.uniform(keys[10], (BATCH, BATCH), jnp.float32) / BATCH
    A = jax.random.uniform(keys[11], (BATCH, BATCH), jnp.float32) / BATCH
    perm_row = jax.random.permutation(keys[12], BATCH)
    perm_col = jax.random.permutation(keys[13], EMB)

    item_emb_hg, sess_emb_hgnn, con_loss = dhcn_forward(
        params, adjacency, session_item, session_len, D, A,
        reversed_sess_item, mask, perm_row, perm_col)
    jax.block_until_ready((item_emb_hg, sess_emb_hgnn, con_loss))
    assert item_emb_hg.shape == (N_NODE, EMB)
    assert sess_emb_hgnn.shape == (BATCH, EMB)
    assert con_loss.shape == ()
    print("KERNEL_OK")
</pallas_src>

<mosaic_0001>
module attributes {stable_mosaic.version = 11 : i64} {
  func.func @kernel(%arg0: memref<104x16xf32, #tpu.memory_space<vmem>>, %arg1: memref<16x32xf32, #tpu.memory_space<vmem>>, %arg2: memref<152x32xf32, #tpu.memory_space<vmem>>, %arg3: memref<24x32xf32, #tpu.memory_space<vmem>>, %arg4: memref<1x1xf32, #tpu.memory_space<smem>>) attributes {dimension_semantics = [], scalar_prefetch = 0 : i64, scratch_operands = 0 : i64, tpu.core_type = #tpu.core_type<tc>} {
    %c0 = arith.constant 0 : index
    %c0_0 = arith.constant 0 : index
    %0 = vector.load %arg0[%c0, %c0_0] : memref<104x16xf32, #tpu.memory_space<vmem>>, vector<104x16xf32>
    %c0_1 = arith.constant 0 : index
    %c0_2 = arith.constant 0 : index
    %1 = vector.load %arg1[%c0_1, %c0_2] : memref<16x32xf32, #tpu.memory_space<vmem>>, vector<16x32xf32>
    %cst = arith.constant dense<0.000000e+00> : vector<104x32xf32>
    %2 = tpu.matmul %0, %1, %cst {dimension_numbers = #tpu.dot_dimension_numbers<[1], [0], [0], [1], [0, 0, 1, 1], [], []>} : vector<104x16xf32>, vector<16x32xf32>, vector<104x32xf32> -> vector<104x32xf32>
    %3 = vector.extract_strided_slice %2 {offsets = [0, 0], sizes = [16, 32], strides = [1, 1]} : vector<104x32xf32> to vector<16x32xf32>
    %4 = vector.extract_strided_slice %2 {offsets = [16, 0], sizes = [64, 32], strides = [1, 1]} : vector<104x32xf32> to vector<64x32xf32>
    %5 = vector.extract_strided_slice %2 {offsets = [80, 0], sizes = [8, 32], strides = [1, 1]} : vector<104x32xf32> to vector<8x32xf32>
    %6 = vector.extract_strided_slice %2 {offsets = [88, 0], sizes = [8, 32], strides = [1, 1]} : vector<104x32xf32> to vector<8x32xf32>
    %7 = vector.extract_strided_slice %2 {offsets = [96, 0], sizes = [8, 32], strides = [1, 1]} : vector<104x32xf32> to vector<8x32xf32>
    %c0_3 = arith.constant 0 : index
    %c0_4 = arith.constant 0 : index
    %8 = vector.load %arg2[%c0_3, %c0_4] : memref<152x32xf32, #tpu.memory_space<vmem>>, vector<152x32xf32>
    %9 = vector.extract_strided_slice %8 {offsets = [0, 0], sizes = [8, 32], strides = [1, 1]} : vector<152x32xf32> to vector<8x32xf32>
    %10 = vector.extract_strided_slice %8 {offsets = [8, 0], sizes = [32, 32], strides = [1, 1]} : vector<152x32xf32> to vector<32x32xf32>
    %11 = vector.extract_strided_slice %8 {offsets = [40, 0], sizes = [32, 32], strides = [1, 1]} : vector<152x32xf32> to vector<32x32xf32>
    %12 = vector.extract_strided_slice %8 {offsets = [72, 0], sizes = [1, 32], strides = [1, 1]} : vector<152x32xf32> to vector<1x32xf32>
    %13 = vector.extract_strided_slice %8 {offsets = [80, 0], sizes = [32, 32], strides = [1, 1]} : vector<152x32xf32> to vector<32x32xf32>
    %14 = vector.extract_strided_slice %8 {offsets = [112, 0], sizes = [1, 32], strides = [1, 1]} : vector<152x32xf32> to vector<1x32xf32>
    %15 = vector.extract_strided_slice %8 {offsets = [120, 0], sizes = [32, 32], strides = [1, 1]} : vector<152x32xf32> to vector<32x32xf32>
    %cst_5 = arith.constant dense<0.000000e+00> : vector<64x32xf32>
    %16 = tpu.matmul %4, %10, %cst_5 {dimension_numbers = #tpu.dot_dimension_numbers<[1], [0], [0], [1], [0, 0, 1, 1], [], []>} : vector<64x32xf32>, vector<32x32xf32>, vector<64x32xf32> -> vector<64x32xf32>
    %17 = vector.shape_cast %16 : vector<64x32xf32> to vector<8x8x32xf32>
    %18 = vector.shape_cast %9 : vector<8x32xf32> to vector<8x1x32xf32>
    %19 = vector.broadcast %18 : vector<8x1x32xf32> to vector<8x8x32xf32>
    %20 = arith.addf %17, %19 : vector<8x8x32xf32>
    %21 = math.tanh %20 : vector<8x8x32xf32>
    %22 = vector.shape_cast %21 : vector<8x8x32xf32> to vector<64x32xf32>
    %cst_6 = arith.constant dense<0.000000e+00> : vector<64x32xf32>
    %23 = tpu.matmul %22, %11, %cst_6 {dimension_numbers = #tpu.dot_dimension_numbers<[1], [0], [0], [1], [0, 0, 1, 1], [], []>} : vector<64x32xf32>, vector<32x32xf32>, vector<64x32xf32> -> vector<64x32xf32>
    %24 = vector.broadcast %12 : vector<1x32xf32> to vector<64x32xf32>
    %25 = arith.addf %23, %24 : vector<64x32xf32>
    %cst_7 = arith.constant dense<0.000000e+00> : vector<8x32xf32>
    %26 = tpu.matmul %5, %13, %cst_7 {dimension_numbers = #tpu.dot_dimension_numbers<[1], [0], [0], [1], [0, 0, 1, 1], [], []>} : vector<8x32xf32>, vector<32x32xf32>, vector<8x32xf32> -> vector<8x32xf32>
    %27 = vector.shape_cast %25 : vector<64x32xf32> to vector<8x8x32xf32>
    %28 = vector.shape_cast %26 : vector<8x32xf32> to vector<1x8x32xf32>
    %29 = vector.broadcast %28 : vector<1x8x32xf32> to vector<8x8x32xf32>
    %30 = arith.addf %27, %29 : vector<8x8x32xf32>
    %31 = arith.negf %30 : vector<8x8x32xf32>
    %32 = math.exp %31 : vector<8x8x32xf32>
    %cst_8 = arith.constant 1.000000e+00 : f32
    %33 = vector.broadcast %cst_8 : f32 to vector<8x8x32xf32>
    %34 = arith.addf %33, %32 : vector<8x8x32xf32>
    %35 = arith.divf %33, %34 : vector<8x8x32xf32>
    %36 = vector.shape_cast %14 : vector<1x32xf32> to vector<1x1x32xf32>
    %37 = vector.broadcast %36 : vector<1x1x32xf32> to vector<8x8x32xf32>
    %38 = arith.mulf %35, %37 : vector<8x8x32xf32>
    %cst_9 = arith.constant dense<0.000000e+00> : vector<8x8xf32>
    %39 = vector.multi_reduction <add>, %38, %cst_9 [2] : vector<8x8x32xf32> to vector<8x8xf32>
    %40 = vector.shape_cast %39 : vector<8x8xf32> to vector<8x8x1xf32>
    %41 = vector.shape_cast %4 : vector<64x32xf32> to vector<8x8x32xf32>
    %42 = vector.broadcast %40 : vector<8x8x1xf32> to vector<8x8x32xf32>
    %43 = arith.mulf %42, %41 : vector<8x8x32xf32>
    %cst_10 = arith.constant dense<0.000000e+00> : vector<8x32xf32>
    %44 = vector.multi_reduction <add>, %43, %cst_10 [0] : vector<8x8x32xf32> to vector<8x32xf32>
    %c0_11 = arith.constant 0 : index
    %c0_12 = arith.constant 0 : index
    %45 = vector.load %arg3[%c0_11, %c0_12] : memref<24x32xf32, #tpu.memory_space<vmem>>, vector<16x32xf32>
    tpu.vector_store %arg3[%c0_11, %c0_12], %3 {strides = array<i32>} : memref<24x32xf32, #tpu.memory_space<vmem>>, vector<16x32xf32>,
    %c16 = arith.constant 16 : index
    %c0_13 = arith.constant 0 : index
    %46 = vector.load %arg3[%c16, %c0_13] : memref<24x32xf32, #tpu.memory_space<vmem>>, vector<8x32xf32>
    tpu.vector_store %arg3[%c16, %c0_13], %44 {strides = array<i32>} : memref<24x32xf32, #tpu.memory_space<vmem>>, vector<8x32xf32>,
    %cst_14 = arith.constant dense<0.000000e+00> : vector<8x32xf32>
    %47 = tpu.matmul %44, %15, %cst_14 {dimension_numbers = #tpu.dot_dimension_numbers<[1], [0], [0], [1], [0, 0, 1, 1], [], []>} : vector<8x32xf32>, vector<32x32xf32>, vector<8x32xf32> -> vector<8x32xf32>
    %48 = arith.mulf %44, %6 : vector<8x32xf32>
    %cst_15 = arith.constant dense<0.000000e+00> : vector<8xf32>
    %49 = vector.multi_reduction <add>, %48, %cst_15 [1] : vector<8x32xf32> to vector<8xf32>
    %50 = vector.shape_cast %49 : vector<8xf32> to vector<8x1xf32>
    %51 = arith.mulf %7, %47 : vector<8x32xf32>
    %cst_16 = arith.constant dense<0.000000e+00> : vector<8xf32>
    %52 = vector.multi_reduction <add>, %51, %cst_16 [1] : vector<8x32xf32> to vector<8xf32>
    %53 = vector.shape_cast %52 : vector<8xf32> to vector<8x1xf32>
    %54 = arith.negf %50 : vector<8x1xf32>
    %55 = math.exp %54 : vector<8x1xf32>
    %cst_17 = arith.constant 1.000000e+00 : f32
    %56 = vector.broadcast %cst_17 : f32 to vector<8x1xf32>
    %57 = arith.addf %56, %55 : vector<8x1xf32>
    %58 = arith.divf %56, %57 : vector<8x1xf32>
    %cst_18 = arith.constant 9.99999993E-9 : f32
    %59 = vector.broadcast %cst_18 : f32 to vector<8x1xf32>
    %60 = arith.addf %59, %58 : vector<8x1xf32>
    %61 = math.log %60 : vector<8x1xf32>
    %cst_19 = arith.constant 0.000000e+00 : f32
    %62 = vector.broadcast %cst_19 : f32 to vector<8x1xf32>
    %63 = arith.subf %62, %61 : vector<8x1xf32>
    %64 = arith.negf %53 : vector<8x1xf32>
    %65 = math.exp %64 : vector<8x1xf32>
    %cst_20 = arith.constant 1.000000e+00 : f32
    %66 = vector.broadcast %cst_20 : f32 to vector<8x1xf32>
    %67 = arith.addf %66, %65 : vector<8x1xf32>
    %68 = arith.divf %66, %67 : vector<8x1xf32>
    %cst_21 = arith.constant 1.000000e+00 : f32
    %69 = vector.broadcast %cst_21 : f32 to vector<8x1xf32>
    %70 = arith.subf %69, %68 : vector<8x1xf32>
    %cst_22 = arith.constant 9.99999993E-9 : f32
    %71 = vector.broadcast %cst_22 : f32 to vector<8x1xf32>
    %72 = arith.addf %71, %70 : vector<8x1xf32>
    %73 = math.log %72 : vector<8x1xf32>
    %74 = arith.subf %63, %73 : vector<8x1xf32>
    %75 = vector.shape_cast %74 : vector<8x1xf32> to vector<1x8x1xf32>
    %cst_23 = arith.constant dense<0.000000e+00> : vector<1xf32>
    %76 = vector.multi_reduction <add>, %75, %cst_23 [1, 2] : vector<1x8x1xf32> to vector<1xf32>
    %77 = vector.shape_cast %76 : vector<1xf32> to vector<1x1x1xf32>
    %78 = vector.extract %77[0, 0, 0] : f32 from vector<1x1x1xf32>
    %c0_24 = arith.constant 0 : index
    %c0_25 = arith.constant 0 : index
    %79 = memref.load %arg4[%c0_24, %c0_25] : memref<1x1xf32, #tpu.memory_space<smem>>
    memref.store %78, %arg4[%c0_24, %c0_25] : memref<1x1xf32, #tpu.memory_space<smem>>
    return
  }
}

</mosaic_0001>

<llo_original>
// kernel: dhcn_forward.1
$region0: #{dhcn_forward.1}
  #allocation0 [shape = 'u32[]', space=smem, size = 0x4, offset = 0x4, fixed_abs, tag = 'smem constant byte address 0x4 - core index']
  #allocation1 [shape = 'u32[144,128]{1,0:T(1,128)}', space=vmem, size = 0x12000, scoped, tag = 'internal scratch']
  %s0 = inlined_call_operand.vmem [shape: f32[104,16], index: 0, kind: input, shape index: {}]
  %s1 = inlined_call_operand.vmem [shape: f32[16,32], index: 1, kind: input, shape index: {}]
  %s2 = inlined_call_operand.vmem [shape: f32[152,32], index: 2, kind: input, shape index: {}]
  %s3 = inlined_call_operand.vmem [shape: f32[24,32], index: 3, kind: output, shape index: {0}]
  %s4 = inlined_call_operand.hbm [shape: f32[1,1], index: 4, kind: output, shape index: {1}]
  %5 = xla_tuple %s3, %s4
  %s6 = sld [smem:[#allocation0]]
  $region30: #{dhcn_forward.1} parent=0
    _
  %s8 = ssub.s32 1, %s6
  %s9 = scalar_select 0, %s8, %s6
  $region1: #{dhcn_forward.1} parent=0
    #allocation2 [shape = 'u8[512]{0}', space=smem, size = 0x200, scoped, tag = 'output window, operand 1, single buffered']
    #allocation3 [shape = 's32[1]{0}', space=sflag, size = 0x4, scoped, tag = 'scoped memory for dhcn_forward.1']
    %10 = vsyncpa [#allocation3], 0
    // Predicated region
    $region2: #{dhcn_forward.1} parent=1 // pred_check
      _
    $region3: #{dhcn_forward.1} parent=1 // pred_check_branch
      %12 = sbr.rel (0) target = $region5
    $region4: #{dhcn_forward.1} parent=1 // pred_region
      _
    $region5: #{dhcn_forward.1} parent=1 // pred_fallthru
      _
    // Predicated region
    $region6: #{dhcn_forward.1} parent=1 // pred_check
      _
    $region7: #{dhcn_forward.1} parent=1 // pred_check_branch
      %14 = sbr.rel (0) target = $region9
    $region8: #{dhcn_forward.1} parent=1 // pred_region
      _
    $region9: #{dhcn_forward.1} parent=1 // pred_fallthru
      _
    // Predicated region
    $region10: #{dhcn_forward.1} parent=1 // pred_check
      _
    $region11: #{dhcn_forward.1} parent=1 // pred_check_branch
      %16 = sbr.rel (0) target = $region13
    $region12: #{dhcn_forward.1} parent=1 // pred_region
      _
    $region13: #{dhcn_forward.1} parent=1 // pred_fallthru
      _
    %v17 = vld [vmem:[%s0] sm:$0xff]
    %v18 = vld [vmem:[%s0 + $0x8] sm:$0xff]
    %v19 = vld [vmem:[%s0 + $0x10] sm:$0xff]
    %v20 = vld [vmem:[%s0 + $0x18] sm:$0xff]
    %v21 = vld [vmem:[%s0 + $0x20] sm:$0xff]
    %v22 = vld [vmem:[%s0 + $0x28] sm:$0xff]
    %v23 = vld [vmem:[%s0 + $0x30] sm:$0xff]
    %v24 = vld [vmem:[%s0 + $0x38] sm:$0xff]
    %v25 = vld [vmem:[%s0 + $0x40] sm:$0xff]
    %v26 = vld [vmem:[%s0 + $0x48] sm:$0xff]
    %v27 = vld [vmem:[%s0 + $0x50] sm:$0xff]
    %v28 = vld [vmem:[%s0 + $0x58] sm:$0xff]
    %v29 = vld [vmem:[%s0 + $0x60] sm:$0xff]
    %v30 = vld [vmem:[%s1] sm:$0xff]
    %v31 = vld [vmem:[%s1 + $0x8] sm:$0xff]
    %vm32 = vcmask 130048
    %v34 = vsel %vm32, %v17, 0
    %v37 = vsel %vm32, %v18, 0
    %v40 = vsel %vm32, %v19, 0
    %v43 = vsel %vm32, %v20, 0
    %v46 = vsel %vm32, %v21, 0
    %v49 = vsel %vm32, %v22, 0
    %v52 = vsel %vm32, %v23, 0
    %v55 = vsel %vm32, %v24, 0
    %v58 = vsel %vm32, %v25, 0
    %v61 = vsel %vm32, %v26, 0
    %v64 = vsel %vm32, %v27, 0
    %v67 = vsel %vm32, %v28, 0
    %v70 = vsel %vm32, %v29, 0
    %72 = vmatprep.subr.mxu0 0.0
    %73 = vmatpush1.msra.mxu0 %v30
    %74 = vmatprep.subr.mxu0 0.0
    %75 = vmatpush1.msra.mxu0 %v31
    %76 = vmatprep.subr.mxu0 0.0
    %77 = vmatpush1.msra.mxu0 0.0
    %78 = vmatprep.subr.mxu0 0.0
    %79 = vmatpush1.msra.mxu0 0.0
    %80 = vmatprep.subr.mxu0 0.0
    %81 = vmatpush1.msra.mxu0 0.0
    %82 = vmatprep.subr.mxu0 0.0
    %83 = vmatpush1.msra.mxu0 0.0
    %84 = vmatprep.subr.mxu0 0.0
    %85 = vmatpush1.msra.mxu0 0.0
    %86 = vmatprep.subr.mxu0 0.0
    %87 = vmatpush1.msra.mxu0 0.0
    %88 = vmatprep.subr.mxu0 0.0
    %89 = vmatpush1.msra.mxu0 0.0
    %90 = vmatprep.subr.mxu0 0.0
    %91 = vmatpush1.msra.mxu0 0.0
    %92 = vmatprep.subr.mxu0 0.0
    %93 = vmatpush1.msra.mxu0 0.0
    %94 = vmatprep.subr.mxu0 0.0
    %95 = vmatpush1.msra.mxu0 0.0
    %96 = vmatprep.subr.mxu0 0.0
    %97 = vmatpush1.msra.mxu0 0.0
    %98 = vmatprep.subr.mxu0 0.0
    %99 = vmatpush1.msra.mxu0 0.0
    %100 = vmatprep.subr.mxu0 0.0
    %101 = vmatpush1.msra.mxu0 0.0
    %102 = vmatprep.subr.mxu0 0.0
    %103 = vmatpush1.msra.mxu0 0.0
    %104 = vmatprep.subr.mxu0 0.0
    %105 = vmatpush1.msra.mxu0 0.0
    %106 = vmatprep.subr.mxu0 0.0
    %107 = vmatpush1.msra.mxu0 0.0
    %108 = vmatprep.subr.mxu0 0.0
    %109 = vmatpush1.msra.mxu0 0.0
    %110 = vmatprep.subr.mxu0 0.0
    %111 = vmatpush1.msra.mxu0 0.0
    %112 = vmatprep.subr.mxu0 0.0
    %113 = vmatpush1.msra.mxu0 0.0
    %114 = vmatprep.subr.mxu0 0.0
    %115 = vmatpush1.msra.mxu0 0.0
    %116 = vmatprep.subr.mxu0 0.0
    %117 = vmatpush1.msra.mxu0 0.0
    %118 = vmatprep.subr.mxu0 0.0
    %119 = vmatpush1.msra.mxu0 0.0
    %120 = vmatprep.subr.mxu0 0.0
    %121 = vmatpush1.msra.mxu0 0.0
    %122 = vmatprep.subr.mxu0 0.0
    %123 = vmatpush1.msra.mxu0 0.0
    %124 = vmatprep.subr.mxu0 0.0
    %125 = vmatpush1.msra.mxu0 0.0
    %126 = vmatprep.subr.mxu0 0.0
    %127 = vmatpush1.msra.mxu0 0.0
    %128 = vmatprep.subr.mxu0 0.0
    %129 = vmatpush1.msra.mxu0 0.0
    %130 = vmatprep.subr.mxu0 0.0
    %131 = vmatpush1.msra.mxu0 0.0
    %132 = vmatprep.subr.mxu0 0.0
    %133 = vmatpush1.msra.mxu0 0.0
    %134 = vmatprep.subr.mxu0 0.0
    %135 = vmatpush1.msra.mxu0 0.0
    %136 = vmatprep.mubr.f32.mxu0 0.0
    %137 = vmatmul.mubr.f32.gmra.mrb[0].mxu0 %v34
    %v138 = vpop.f32.mrb[0].mxu0
    %v139 = vadd.f32 0.0, %v138
    %v140 = vpop.f32.mrb[0].mxu0
    %141 = vmatprep.mubr.f32.mxu0 0.0
    %142 = vmatmul.mubr.f32.gmra.mrb[0].mxu0 %v37
    %v143 = vpop.f32.mrb[0].mxu0
    %v144 = vadd.f32 0.0, %v143
    %v145 = vpop.f32.mrb[0].mxu0
    %146 = vmatprep.mubr.f32.mxu0 0.0
    %147 = vmatmul.mubr.f32.gmra.mrb[0].mxu0 %v40
    %v148 = vpop.f32.mrb[0].mxu0
    %v149 = vadd.f32 0.0, %v148
    %v150 = vpop.f32.mrb[0].mxu0
    %151 = vmatprep.mubr.f32.mxu0 0.0
    %152 = vmatmul.mubr.f32.gmra.mrb[0].mxu0 %v43
    %v153 = vpop.f32.mrb[0].mxu0
    %v154 = vadd.f32 0.0, %v153
    %v155 = vpop.f32.mrb[0].mxu0
    %156 = vmatprep.mubr.f32.mxu0 0.0
    %157 = vmatmul.mubr.f32.gmra.mrb[0].mxu0 %v46
    %v158 = vpop.f32.mrb[0].mxu0
    %v159 = vadd.f32 0.0, %v158
    %v160 = vpop.f32.mrb[0].mxu0
    %161 = vmatprep.mubr.f32.mxu0 0.0
    %162 = vmatmul.mubr.f32.gmra.mrb[0].mxu0 %v49
    %v163 = vpop.f32.mrb[0].mxu0
    %v164 = vadd.f32 0.0, %v163
    %v165 = vpop.f32.mrb[0].mxu0
    %166 = vmatprep.mubr.f32.mxu0 0.0
    %167 = vmatmul.mubr.f32.gmra.mrb[0].mxu0 %v52
    %v168 = vpop.f32.mrb[0].mxu0
    %v169 = vadd.f32 0.0, %v168
    %v170 = vpop.f32.mrb[0].mxu0
    %171 = vmatprep.mubr.f32.mxu0 0.0
    %172 = vmatmul.mubr.f32.gmra.mrb[0].mxu0 %v55
    %v173 = vpop.f32.mrb[0].mxu0
    %v174 = vadd.f32 0.0, %v173
    %v175 = vpop.f32.mrb[0].mxu0
    %176 = vmatprep.mubr.f32.mxu0 0.0
    %177 = vmatmul.mubr.f32.gmra.mrb[0].mxu0 %v58
    %v178 = vpop.f32.mrb[0].mxu0
    %v179 = vadd.f32 0.0, %v178
    %v180 = vpop.f32.mrb[0].mxu0
    %181 = vmatprep.mubr.f32.mxu0 0.0
    %182 = vmatmul.mubr.f32.gmra.mrb[0].mxu0 %v61
    %v183 = vpop.f32.mrb[0].mxu0
    %v184 = vadd.f32 0.0, %v183
    %v185 = vpop.f32.mrb[0].mxu0
    %186 = vmatprep.mubr.f32.mxu0 0.0
    %187 = vmatmul.mubr.f32.gmra.mrb[0].mxu0 %v64
    %v188 = vpop.f32.mrb[0].mxu0
    %v189 = vadd.f32 0.0, %v188
    %v190 = vpop.f32.mrb[0].mxu0
    %191 = vmatprep.mubr.f32.mxu0 0.0
    %192 = vmatmul.mubr.f32.gmra.mrb[0].mxu0 %v67
    %v193 = vpop.f32.mrb[0].mxu0
    %v194 = vadd.f32 0.0, %v193
    %v195 = vpop.f32.mrb[0].mxu0
    %196 = vmatprep.mubr.f32.mxu0 0.0
    %197 = vmatmul.mubr.f32.gmra.mrb[0].mxu0 %v70
    %v198 = vpop.f32.mrb[0].mxu0
    %v199 = vadd.f32 0.0, %v198
    %v200 = vpop.f32.mrb[0].mxu0
    %201 = vdwg.mxu0
    %v202 = vld [vmem:[%s2] sm:$0xff]
    %v203 = vld [vmem:[%s2 + $0x8] sm:$0xff]
    %v204 = vld [vmem:[%s2 + $0x10] sm:$0xff]
    %v205 = vld [vmem:[%s2 + $0x18] sm:$0xff]
    %v206 = vld [vmem:[%s2 + $0x20] sm:$0xff]
    %v207 = vld [vmem:[%s2 + $0x28] sm:$0xff]
    %v208 = vld [vmem:[%s2 + $0x30] sm:$0xff]
    %v209 = vld [vmem:[%s2 + $0x38] sm:$0xff]
    %v210 = vld [vmem:[%s2 + $0x40] sm:$0xff]
    %v211 = vld [vmem:[%s2 + $0x48] sm:$0xff]
    %v212 = vld [vmem:[%s2 + $0x50] sm:$0xff]
    %v213 = vld [vmem:[%s2 + $0x58] sm:$0xff]
    %v214 = vld [vmem:[%s2 + $0x60] sm:$0xff]
    %v215 = vld [vmem:[%s2 + $0x68] sm:$0xff]
    %v216 = vld [vmem:[%s2 + $0x70] sm:$0xff]
    %v217 = vld [vmem:[%s2 + $0x78] sm:$0xff]
    %v218 = vld [vmem:[%s2 + $0x80] sm:$0xff]
    %v219 = vld [vmem:[%s2 + $0x88] sm:$0xff]
    %v220 = vld [vmem:[%s2 + $0x90] sm:$0xff]
    %vm221 = vcmask 261120
    %v223 = vsel %vm221, %v149, 0
    %v226 = vsel %vm221, %v154, 0
    %v229 = vsel %vm221, %v159, 0
    %v232 = vsel %vm221, %v164, 0
    %v235 = vsel %vm221, %v169, 0
    %v238 = vsel %vm221, %v174, 0
    %v241 = vsel %vm221, %v179, 0
    %v244 = vsel %vm221, %v184, 0
    %246 = vmatprep.subr.mxu0 0.0
    %247 = vmatpush1.msra.mxu0 %v203
    %248 = vmatprep.subr.mxu0 0.0
    %249 = vmatpush1.msra.mxu0 %v204
    %250 = vmatprep.subr.mxu0 0.0
    %251 = vmatpush1.msra.mxu0 %v205
    %252 = vmatprep.subr.mxu0 0.0
    %253 = vmatpush1.msra.mxu0 %v206
    %254 = vmatprep.subr.mxu0 0.0
    %255 = vmatpush1.msra.mxu0 0.0
    %256 = vmatprep.subr.mxu0 0.0
    %257 = vmatpush1.msra.mxu0 0.0
    %258 = vmatprep.subr.mxu0 0.0
    %259 = vmatpush1.msra.mxu0 0.0
    %260 = vmatprep.subr.mxu0 0.0
    %261 = vmatpush1.msra.mxu0 0.0
    %262 = vmatprep.subr.mxu0 0.0
    %263 = vmatpush1.msra.mxu0 0.0
    %264 = vmatprep.subr.mxu0 0.0
    %265 = vmatpush1.msra.mxu0 0.0
    %266 = vmatprep.subr.mxu0 0.0
    %267 = vmatpush1.msra.mxu0 0.0
    %268 = vmatprep.subr.mxu0 0.0
    %269 = vmatpush1.msra.mxu0 0.0
    %270 = vmatprep.subr.mxu0 0.0
    %271 = vmatpush1.msra.mxu0 0.0
    %272 = vmatprep.subr.mxu0 0.0
    %273 = vmatpush1.msra.mxu0 0.0
    %274 = vmatprep.subr.mxu0 0.0
    %275 = vmatpush1.msra.mxu0 0.0
    %276 = vmatprep.subr.mxu0 0.0
    %277 = vmatpush1.msra.mxu0 0.0
    %278 = vmatprep.subr.mxu0 0.0
    %279 = vmatpush1.msra.mxu0 0.0
    %280 = vmatprep.subr.mxu0 0.0
    %281 = vmatpush1.msra.mxu0 0.0
    %282 = vmatprep.subr.mxu0 0.0
    %283 = vmatpush1.msra.mxu0 0.0
    %284 = vmatprep.subr.mxu0 0.0
    %285 = vmatpush1.msra.mxu0 0.0
    %286 = vmatprep.subr.mxu0 0.0
    %287 = vmatpush1.msra.mxu0 0.0
    %288 = vmatprep.subr.mxu0 0.0
    %289 = vmatpush1.msra.mxu0 0.0
    %290 = vmatprep.subr.mxu0 0.0
    %291 = vmatpush1.msra.mxu0 0.0
    %292 = vmatprep.subr.mxu0 0.0
    %293 = vmatpush1.msra.mxu0 0.0
    %294 = vmatprep.subr.mxu0 0.0
    %295 = vmatpush1.msra.mxu0 0.0
    %296 = vmatprep.subr.mxu0 0.0
    %297 = vmatpush1.msra.mxu0 0.0
    %298 = vmatprep.subr.mxu0 0.0
    %299 = vmatpush1.msra.mxu0 0.0
    %300 = vmatprep.subr.mxu0 0.0
    %301 = vmatpush1.msra.mxu0 0.0
    %302 = vmatprep.subr.mxu0 0.0
    %303 = vmatpush1.msra.mxu0 0.0
    %304 = vmatprep.subr.mxu0 0.0
    %305 = vmatpush1.msra.mxu0 0.0
    %306 = vmatprep.subr.mxu0 0.0
    %307 = vmatpush1.msra.mxu0 0.0
    %308 = vmatprep.subr.mxu0 0.0
    %309 = vmatpush1.msra.mxu0 0.0
    %310 = vmatprep.mubr.f32.mxu0 0.0
    %311 = vmatmul.mubr.f32.gmra.mrb[0].mxu0 %v223
    %v312 = vpop.f32.mrb[0].mxu0
    %v313 = vadd.f32 0.0, %v312
    %v314 = vpop.f32.mrb[0].mxu0
    %315 = vmatprep.mubr.f32.mxu0 0.0
    %316 = vmatmul.mubr.f32.gmra.mrb[0].mxu0 %v226
    %v317 = vpop.f32.mrb[0].mxu0
    %v318 = vadd.f32 0.0, %v317
    %v319 = vpop.f32.mrb[0].mxu0
    %320 = vmatprep.mubr.f32.mxu0 0.0
    %321 = vmatmul.mubr.f32.gmra.mrb[0].mxu0 %v229
    %v322 = vpop.f32.mrb[0].mxu0
    %v323 = vadd.f32 0.0, %v322
    %v324 = vpop.f32.mrb[0].mxu0
    %325 = vmatprep.mubr.f32.mxu0 0.0
    %326 = vmatmul.mubr.f32.gmra.mrb[0].mxu0 %v232
    %v327 = vpop.f32.mrb[0].mxu0
    %v328 = vadd.f32 0.0, %v327
    %v329 = vpop.f32.mrb[0].mxu0
    %330 = vmatprep.mubr.f32.mxu0 0.0
    %331 = vmatmul.mubr.f32.gmra.mrb[0].mxu0 %v235
    %v332 = vpop.f32.mrb[0].mxu0
    %v333 = vadd.f32 0.0, %v332
    %v334 = vpop.f32.mrb[0].mxu0
    %335 = vmatprep.mubr.f32.mxu0 0.0
    %336 = vmatmul.mubr.f32.gmra.mrb[0].mxu0 %v238
    %v337 = vpop.f32.mrb[0].mxu0
    %v338 = vadd.f32 0.0, %v337
    %v339 = vpop.f32.mrb[0].mxu0
    %340 = vmatprep.mubr.f32.mxu0 0.0
    %341 = vmatmul.mubr.f32.gmra.mrb[0].mxu0 %v241
    %v342 = vpop.f32.mrb[0].mxu0
    %v343 = vadd.f32 0.0, %v342
    %v344 = vpop.f32.mrb[0].mxu0
    %345 = vmatprep.mubr.f32.mxu0 0.0
    %346 = vmatmul.mubr.f32.gmra.mrb[0].mxu0 %v244
    %v347 = vpop.f32.mrb[0].mxu0
    %v348 = vadd.f32 0.0, %v347
    %v349 = vpop.f32.mrb[0].mxu0
    %350 = vdwg.mxu0
    %v352 = vcombine.high %v202, %v202
    %v354 = vunpack.c.l.s4 1966171168
    %v355 = vunpack.c.0.s8 %v354
    %v356 = vlaneseq
    %v357 = vshrl.u32 %v356, 7
    %v358 = vsub.s32 %v355, %v357
    %v359 = vrot.slane %v202, %v358
    %v361 = vunpack.c.l.s4 1966171168
    %v362 = vunpack.c.0.s8 %v361
    %v363 = vlaneseq
    %v364 = vshrl.u32 %v363, 7
    %v365 = vsub.s32 %v362, %v364
    %v366 = vrot.slane %v352, %v365
    %v367 = vcombine.high %v359, %v359
    %v368 = vcombine.high %v366, %v366
    %v370 = vunpack.c.l.s4 1966171168
    %v371 = vunpack.c.0.s8 %v370
    %v372 = vlaneseq
    %v373 = vshrl.u32 %v372, 7
    %v374 = vsub.s32 %v371, %v373
    %v375 = vrot.slane %v359, %v374
    %v377 = vunpack.c.l.s4 1966171168
    %v378 = vunpack.c.0.s8 %v377
    %v379 = vlaneseq
    %v380 = vshrl.u32 %v379, 7
    %v381 = vsub.s32 %v378, %v380
    %v382 = vrot.slane %v366, %v381
    %v384 = vunpack.c.l.s4 1966171168
    %v385 = vunpack.c.0.s8 %v384
    %v386 = vlaneseq
    %v387 = vshrl.u32 %v386, 7
    %v388 = vsub.s32 %v385, %v387
    %v389 = vrot.slane %v367, %v388
    %v391 = vunpack.c.l.s4 1966171168
    %v392 = vunpack.c.0.s8 %v391
    %v393 = vlaneseq
    %v394 = vshrl.u32 %v393, 7
    %v395 = vsub.s32 %v392, %v394
    %v396 = vrot.slane %v368, %v395
    %v397 = vcombine.high %v375, %v375
    %v398 = vcombine.high %v382, %v382
    %v399 = vcombine.high %v389, %v389
    %v400 = vcombine.high %v396, %v396
    %v401 = vlaneseq
    %v402 = vshrl.u32 %v401, 7
    %v403 = vsub.s32 0, %v402
    %v404 = vrot.slane %v375, %v403
    %v405 = vlaneseq
    %v406 = vshrl.u32 %v405, 7
    %v407 = vsub.s32 0, %v406
    %v408 = vrot.slane %v389, %v407
    %v409 = vlaneseq
    %v410 = vshrl.u32 %v409, 7
    %v411 = vsub.s32 0, %v410
    %v412 = vrot.slane %v397, %v411
    %v413 = vlaneseq
    %v414 = vshrl.u32 %v413, 7
    %v415 = vsub.s32 0, %v414
    %v416 = vrot.slane %v399, %v415
    %v417 = vlaneseq
    %v418 = vshrl.u32 %v417, 7
    %v419 = vsub.s32 0, %v418
    %v420 = vrot.slane %v382, %v419
    %v421 = vlaneseq
    %v422 = vshrl.u32 %v421, 7
    %v423 = vsub.s32 0, %v422
    %v424 = vrot.slane %v396, %v423
    %v425 = vlaneseq
    %v426 = vshrl.u32 %v425, 7
    %v427 = vsub.s32 0, %v426
    %v428 = vrot.slane %v398, %v427
    %v429 = vlaneseq
    %v430 = vshrl.u32 %v429, 7
    %v431 = vsub.s32 0, %v430
    %v432 = vrot.slane %v400, %v431
    %v441 = vadd.f32 %v313, %v404
    %v442 = vadd.f32 %v318, %v408
    %v443 = vadd.f32 %v323, %v412
    %v444 = vadd.f32 %v328, %v416
    %v445 = vadd.f32 %v333, %v420
    %v446 = vadd.f32 %v338, %v424
    %v447 = vadd.f32 %v343, %v428
    %v448 = vadd.f32 %v348, %v432
    %v449 = vtanh.pop %v441
    %v450 = vtanh.pop %v442
    %v451 = vtanh.pop %v443
    %v452 = vtanh.pop %v444
    %v453 = vtanh.pop %v445
    %v454 = vtanh.pop %v446
    %v455 = vtanh.pop %v447
    %v456 = vtanh.pop %v448
    %v457 = vlaneseq
    %v458 = vshrl.u32 %v457, 7
    %v459 = vsub.s32 0, %v458
    %v460 = vrot.slane %v211, %v459
    %v462 = vsel %vm221, %v449, 0
    %v465 = vsel %vm221, %v450, 0
    %v468 = vsel %vm221, %v451, 0
    %v471 = vsel %vm221, %v452, 0
    %v474 = vsel %vm221, %v453, 0
    %v477 = vsel %vm221, %v454, 0
    %v480 = vsel %vm221, %v455, 0
    %v483 = vsel %vm221, %v456, 0
    %485 = vmatprep.subr.mxu0 0.0
    %486 = vmatpush1.msra.mxu0 %v207
    %487 = vmatprep.subr.mxu0 0.0
    %488 = vmatpush1.msra.mxu0 %v208
    %489 = vmatprep.subr.mxu0 0.0
    %490 = vmatpush1.msra.mxu0 %v209
    %491 = vmatprep.subr.mxu0 0.0
    %492 = vmatpush1.msra.mxu0 %v210
    %493 = vmatprep.subr.mxu0 0.0
    %494 = vmatpush1.msra.mxu0 0.0
    %495 = vmatprep.subr.mxu0 0.0
    %496 = vmatpush1.msra.mxu0 0.0
    %497 = vmatprep.subr.mxu0 0.0
    %498 = vmatpush1.msra.mxu0 0.0
    %499 = vmatprep.subr.mxu0 0.0
    %500 = vmatpush1.msra.mxu0 0.0
    %501 = vmatprep.subr.mxu0 0.0
    %502 = vmatpush1.msra.mxu0 0.0
    %503 = vmatprep.subr.mxu0 0.0
    %504 = vmatpush1.msra.mxu0 0.0
    %505 = vmatprep.subr.mxu0 0.0
    %506 = vmatpush1.msra.mxu0 0.0
    %507 = vmatprep.subr.mxu0 0.0
    %508 = vmatpush1.msra.mxu0 0.0
    %509 = vmatprep.subr.mxu0 0.0
    %510 = vmatpush1.msra.mxu0 0.0
    %511 = vmatprep.subr.mxu0 0.0
    %512 = vmatpush1.msra.mxu0 0.0
    %513 = vmatprep.subr.mxu0 0.0
    %514 = vmatpush1.msra.mxu0 0.0
    %515 = vmatprep.subr.mxu0 0.0
    %516 = vmatpush1.msra.mxu0 0.0
    %517 = vmatprep.subr.mxu0 0.0
    %518 = vmatpush1.msra.mxu0 0.0
    %519 = vmatprep.subr.mxu0 0.0
    %520 = vmatpush1.msra.mxu0 0.0
    %521 = vmatprep.subr.mxu0 0.0
    %522 = vmatpush1.msra.mxu0 0.0
    %523 = vmatprep.subr.mxu0 0.0
    %524 = vmatpush1.msra.mxu0 0.0
    %525 = vmatprep.subr.mxu0 0.0
    %526 = vmatpush1.msra.mxu0 0.0
    %527 = vmatprep.subr.mxu0 0.0
    %528 = vmatpush1.msra.mxu0 0.0
    %529 = vmatprep.subr.mxu0 0.0
    %530 = vmatpush1.msra.mxu0 0.0
    %531 = vmatprep.subr.mxu0 0.0
    %532 = vmatpush1.msra.mxu0 0.0
    %533 = vmatprep.subr.mxu0 0.0
    %534 = vmatpush1.msra.mxu0 0.0
    %535 = vmatprep.subr.mxu0 0.0
    %536 = vmatpush1.msra.mxu0 0.0
    %537 = vmatprep.subr.mxu0 0.0
    %538 = vmatpush1.msra.mxu0 0.0
    %539 = vmatprep.subr.mxu0 0.0
    %540 = vmatpush1.msra.mxu0 0.0
    %541 = vmatprep.subr.mxu0 0.0
    %542 = vmatpush1.msra.mxu0 0.0
    %543 = vmatprep.subr.mxu0 0.0
    %544 = vmatpush1.msra.mxu0 0.0
    %545 = vmatprep.subr.mxu0 0.0
    %546 = vmatpush1.msra.mxu0 0.0
    %547 = vmatprep.subr.mxu0 0.0
    %548 = vmatpush1.msra.mxu0 0.0
    %549 = vmatprep.mubr.f32.mxu0 0.0
    %550 = vmatmul.mubr.f32.gmra.mrb[0].mxu0 %v462
    %v551 = vpop.f32.mrb[0].mxu0
    %v552 = vadd.f32 %v460, %v551
    %v553 = vpop.f32.mrb[0].mxu0
    %554 = vmatprep.mubr.f32.mxu0 0.0
    %555 = vmatmul.mubr.f32.gmra.mrb[0].mxu0 %v465
    %v556 = vpop.f32.mrb[0].mxu0
    %v557 = vadd.f32 %v460, %v556
    %v558 = vpop.f32.mrb[0].mxu0
    %559 = vmatprep.mubr.f32.mxu0 0.0
    %560 = vmatmul.mubr.f32.gmra.mrb[0].mxu0 %v468
    %v561 = vpop.f32.mrb[0].mxu0
    %v562 = vadd.f32 %v460, %v561
    %v563 = vpop.f32.mrb[0].mxu0
    %564 = vmatprep.mubr.f32.mxu0 0.0
    %565 = vmatmul.mubr.f32.gmra.mrb[0].mxu0 %v471
    %v566 = vpop.f32.mrb[0].mxu0
    %v567 = vadd.f32 %v460, %v566
    %v568 = vpop.f32.mrb[0].mxu0
    %569 = vmatprep.mubr.f32.mxu0 0.0
    %570 = vmatmul.mubr.f32.gmra.mrb[0].mxu0 %v474
    %v571 = vpop.f32.mrb[0].mxu0
    %v572 = vadd.f32 %v460, %v571
    %v573 = vpop.f32.mrb[0].mxu0
    %574 = vmatprep.mubr.f32.mxu0 0.0
    %575 = vmatmul.mubr.f32.gmra.mrb[0].mxu0 %v477
    %v576 = vpop.f32.mrb[0].mxu0
    %v577 = vadd.f32 %v460, %v576
    %v578 = vpop.f32.mrb[0].mxu0
    %579 = vmatprep.mubr.f32.mxu0 0.0
    %580 = vmatmul.mubr.f32.gmra.mrb[0].mxu0 %v480
    %v581 = vpop.f32.mrb[0].mxu0
    %v582 = vadd.f32 %v460, %v581
    %v583 = vpop.f32.mrb[0].mxu0
    %584 = vmatprep.mubr.f32.mxu0 0.0
    %585 = vmatmul.mubr.f32.gmra.mrb[0].mxu0 %v483
    %v586 = vpop.f32.mrb[0].mxu0
    %v587 = vadd.f32 %v460, %v586
    %v588 = vpop.f32.mrb[0].mxu0
    %589 = vdwg.mxu0
    %v591 = vsel %vm221, %v189, 0
    %593 = vmatprep.subr.mxu0 0.0
    %594 = vmatpush1.msra.mxu0 %v212
    %595 = vmatprep.subr.mxu0 0.0
    %596 = vmatpush1.msra.mxu0 %v213
    %597 = vmatprep.subr.mxu0 0.0
    %598 = vmatpush1.msra.mxu0 %v214
    %599 = vmatprep.subr.mxu0 0.0
    %600 = vmatpush1.msra.mxu0 %v215
    %601 = vmatprep.subr.mxu0 0.0
    %602 = vmatpush1.msra.mxu0 0.0
    %603 = vmatprep.subr.mxu0 0.0
    %604 = vmatpush1.msra.mxu0 0.0
    %605 = vmatprep.subr.mxu0 0.0
    %606 = vmatpush1.msra.mxu0 0.0
    %607 = vmatprep.subr.mxu0 0.0
    %608 = vmatpush1.msra.mxu0 0.0
    %609 = vmatprep.subr.mxu0 0.0
    %610 = vmatpush1.msra.mxu0 0.0
    %611 = vmatprep.subr.mxu0 0.0
    %612 = vmatpush1.msra.mxu0 0.0
    %613 = vmatprep.subr.mxu0 0.0
    %614 = vmatpush1.msra.mxu0 0.0
    %615 = vmatprep.subr.mxu0 0.0
    %616 = vmatpush1.msra.mxu0 0.0
    %617 = vmatprep.subr.mxu0 0.0
    %618 = vmatpush1.msra.mxu0 0.0
    %619 = vmatprep.subr.mxu0 0.0
    %620 = vmatpush1.msra.mxu0 0.0
    %621 = vmatprep.subr.mxu0 0.0
    %622 = vmatpush1.msra.mxu0 0.0
    %623 = vmatprep.subr.mxu0 0.0
    %624 = vmatpush1.msra.mxu0 0.0
    %625 = vmatprep.subr.mxu0 0.0
    %626 = vmatpush1.msra.mxu0 0.0
    %627 = vmatprep.subr.mxu0 0.0
    %628 = vmatpush1.msra.mxu0 0.0
    %629 = vmatprep.subr.mxu0 0.0
    %630 = vmatpush1.msra.mxu0 0.0
    %631 = vmatprep.subr.mxu0 0.0
    %632 = vmatpush1.msra.mxu0 0.0
    %633 = vmatprep.subr.mxu0 0.0
    %634 = vmatpush1.msra.mxu0 0.0
    %635 = vmatprep.subr.mxu0 0.0
    %636 = vmatpush1.msra.mxu0 0.0
    %637 = vmatprep.subr.mxu0 0.0
    %638 = vmatpush1.msra.mxu0 0.0
    %639 = vmatprep.subr.mxu0 0.0
    %640 = vmatpush1.msra.mxu0 0.0
    %641 = vmatprep.subr.mxu0 0.0
    %642 = vmatpush1.msra.mxu0 0.0
    %643 = vmatprep.subr.mxu0 0.0
    %644 = vmatpush1.msra.mxu0 0.0
    %645 = vmatprep.subr.mxu0 0.0
    %646 = vmatpush1.msra.mxu0 0.0
    %647 = vmatprep.subr.mxu0 0.0
    %648 = vmatpush1.msra.mxu0 0.0
    %649 = vmatprep.subr.mxu0 0.0
    %650 = vmatpush1.msra.mxu0 0.0
    %651 = vmatprep.subr.mxu0 0.0
    %652 = vmatpush1.msra.mxu0 0.0
    %653 = vmatprep.subr.mxu0 0.0
    %654 = vmatpush1.msra.mxu0 0.0
    %655 = vmatprep.subr.mxu0 0.0
    %656 = vmatpush1.msra.mxu0 0.0
    %657 = vmatprep.mubr.f32.mxu0 0.0
    %658 = vmatmul.mubr.f32.gmra.mrb[0].mxu0 %v591
    %v659 = vpop.f32.mrb[0].mxu0
    %v660 = vadd.f32 0.0, %v659
    %v661 = vpop.f32.mrb[0].mxu0
    %662 = vdwg.mxu0
    %v663 = vadd.f32 %v552, %v660
    %v664 = vadd.f32 %v557, %v660
    %v665 = vadd.f32 %v562, %v660
    %v666 = vadd.f32 %v567, %v660
    %v667 = vadd.f32 %v572, %v660
    %v668 = vadd.f32 %v577, %v660
    %v669 = vadd.f32 %v582, %v660
    %v670 = vadd.f32 %v587, %v660
    %v671 = vxor.u32 %v663, 2147483648
    %v672 = vxor.u32 %v664, 2147483648
    %v673 = vxor.u32 %v665, 2147483648
    %v674 = vxor.u32 %v666, 2147483648
    %v675 = vxor.u32 %v667, 2147483648
    %v676 = vxor.u32 %v668, 2147483648
    %v677 = vxor.u32 %v669, 2147483648
    %v678 = vxor.u32 %v670, 2147483648
    %v679 = vmul.f32 %v671, 1.442695
    %v680 = vpow.pop %v679
    %v681 = vmul.f32 %v672, 1.442695
    %v682 = vpow.pop %v681
    %v683 = vmul.f32 %v673, 1.442695
    %v684 = vpow.pop %v683
    %v685 = vmul.f32 %v674, 1.442695
    %v686 = vpow.pop %v685
    %v687 = vmul.f32 %v675, 1.442695
    %v688 = vpow.pop %v687
    %v689 = vmul.f32 %v676, 1.442695
    %v690 = vpow.pop %v689
    %v691 = vmul.f32 %v677, 1.442695
    %v692 = vpow.pop %v691
    %v693 = vmul.f32 %v678, 1.442695
    %v694 = vpow.pop %v693
    %v695 = vadd.f32 %v680, 1.0
    %v696 = vadd.f32 %v682, 1.0
    %v697 = vadd.f32 %v684, 1.0
    %v698 = vadd.f32 %v686, 1.0
    %v699 = vadd.f32 %v688, 1.0
    %v700 = vadd.f32 %v690, 1.0
    %v701 = vadd.f32 %v692, 1.0
    %v702 = vadd.f32 %v694, 1.0
    %v703 = vrcp.pop %v695
    %v704 = vmul.f32 1.0, %v703
    %v705 = vrcp.pop %v696
    %v706 = vmul.f32 1.0, %v705
    %v707 = vrcp.pop %v697
    %v708 = vmul.f32 1.0, %v707
    %v709 = vrcp.pop %v698
    %v710 = vmul.f32 1.0, %v709
    %v711 = vrcp.pop %v699
    %v712 = vmul.f32 1.0, %v711
    %v713 = vrcp.pop %v700
    %v714 = vmul.f32 1.0, %v713
    %v715 = vrcp.pop %v701
    %v716 = vmul.f32 1.0, %v715
    %v717 = vrcp.pop %v702
    %v718 = vmul.f32 1.0, %v717
    %v719 = vlaneseq
    %v720 = vshrl.u32 %v719, 7
    %v721 = vsub.s32 0, %v720
    %v722 = vrot.slane %v216, %v721
    %v723 = vmul.f32 %v704, %v722
    %v724 = vmul.f32 %v706, %v722
    %v725 = vmul.f32 %v708, %v722
    %v726 = vmul.f32 %v710, %v722
    %v727 = vmul.f32 %v712, %v722
    %v728 = vmul.f32 %v714, %v722
    %v729 = vmul.f32 %v716, %v722
    %v730 = vmul.f32 %v718, %v722
    %v731 = vsel %vm221, %v723, 0.0
    %732 = vadd.xlane.f32.xlu0 %v731
    %v733 = vpop.xlane.xlu0 %732
    %v734 = vsel %vm221, %v724, 0.0
    %735 = vadd.xlane.f32.xlu0 %v734
    %v736 = vpop.xlane.xlu0 %735
    %v737 = vsel %vm221, %v725, 0.0
    %738 = vadd.xlane.f32.xlu0 %v737
    %v739 = vpop.xlane.xlu0 %738
    %v740 = vsel %vm221, %v726, 0.0
    %741 = vadd.xlane.f32.xlu0 %v740
    %v742 = vpop.xlane.xlu0 %741
    %v743 = vsel %vm221, %v727, 0.0
    %744 = vadd.xlane.f32.xlu0 %v743
    %v745 = vpop.xlane.xlu0 %744
    %v746 = vsel %vm221, %v728, 0.0
    %747 = vadd.xlane.f32.xlu0 %v746
    %v748 = vpop.xlane.xlu0 %747
    %v749 = vsel %vm221, %v729, 0.0
    %750 = vadd.xlane.f32.xlu0 %v749
    %v751 = vpop.xlane.xlu0 %750
    %v752 = vsel %vm221, %v730, 0.0
    %753 = vadd.xlane.f32.xlu0 %v752
    %v754 = vpop.xlane.xlu0 %753
    %v755 = vmul.f32 %v733, %v149
    %v756 = vmul.f32 %v736, %v154
    %v757 = vmul.f32 %v739, %v159
    %v758 = vmul.f32 %v742, %v164
    %v759 = vmul.f32 %v745, %v169
    %v760 = vmul.f32 %v748, %v174
    %v761 = vmul.f32 %v751, %v179
    %v762 = vmul.f32 %v754, %v184
    %v763 = vsel %vm221, %v755, 0.0
    %v764 = vsel %vm221, %v756, 0.0
    %v765 = vadd.f32 %v763, %v764
    %v766 = vsel %vm221, %v757, 0.0
    %v767 = vadd.f32 %v765, %v766
    %v768 = vsel %vm221, %v758, 0.0
    %v769 = vadd.f32 %v767, %v768
    %v770 = vsel %vm221, %v759, 0.0
    %v771 = vadd.f32 %v769, %v770
    %v772 = vsel %vm221, %v760, 0.0
    %v773 = vadd.f32 %v771, %v772
    %v774 = vsel %vm221, %v761, 0.0
    %v775 = vadd.f32 %v773, %v774
    %v776 = vsel %vm221, %v762, 0.0
    %v777 = vadd.f32 %v775, %v776
    %778 = vst.msk [vmem:[%s3] sm:$0xff] %vm221, %v139
    %779 = vst.msk [vmem:[%s3 + $0x8] sm:$0xff] %vm221, %v144
    %780 = vst.msk [vmem:[%s3 + $0x10] sm:$0xff] %vm221, %v777
    %v782 = vsel %vm221, %v777, 0
    %784 = vmatprep.subr.mxu0 0.0
    %785 = vmatpush1.msra.mxu0 %v217
    %786 = vmatprep.subr.mxu0 0.0
    %787 = vmatpush1.msra.mxu0 %v218
    %788 = vmatprep.subr.mxu0 0.0
    %789 = vmatpush1.msra.mxu0 %v219
    %790 = vmatprep.subr.mxu0 0.0
    %791 = vmatpush1.msra.mxu0 %v220
    %792 = vmatprep.subr.mxu0 0.0
    %793 = vmatpush1.msra.mxu0 0.0
    %794 = vmatprep.subr.mxu0 0.0
    %795 = vmatpush1.msra.mxu0 0.0
    %796 = vmatprep.subr.mxu0 0.0
    %797 = vmatpush1.msra.mxu0 0.0
    %798 = vmatprep.subr.mxu0 0.0
    %799 = vmatpush1.msra.mxu0 0.0
    %800 = vmatprep.subr.mxu0 0.0
    %801 = vmatpush1.msra.mxu0 0.0
    %802 = vmatprep.subr.mxu0 0.0
    %803 = vmatpush1.msra.mxu0 0.0
    %804 = vmatprep.subr.mxu0 0.0
    %805 = vmatpush1.msra.mxu0 0.0
    %806 = vmatprep.subr.mxu0 0.0
    %807 = vmatpush1.msra.mxu0 0.0
    %808 = vmatprep.subr.mxu0 0.0
    %809 = vmatpush1.msra.mxu0 0.0
    %810 = vmatprep.subr.mxu0 0.0
    %811 = vmatpush1.msra.mxu0 0.0
    %812 = vmatprep.subr.mxu0 0.0
    %813 = vmatpush1.msra.mxu0 0.0
    %814 = vmatprep.subr.mxu0 0.0
    %815 = vmatpush1.msra.mxu0 0.0
    %816 = vmatprep.subr.mxu0 0.0
    %817 = vmatpush1.msra.mxu0 0.0
    %818 = vmatprep.subr.mxu0 0.0
    %819 = vmatpush1.msra.mxu0 0.0
    %820 = vmatprep.subr.mxu0 0.0
    %821 = vmatpush1.msra.mxu0 0.0
    %822 = vmatprep.subr.mxu0 0.0
    %823 = vmatpush1.msra.mxu0 0.0
    %824 = vmatprep.subr.mxu0 0.0
    %825 = vmatpush1.msra.mxu0 0.0
    %826 = vmatprep.subr.mxu0 0.0
    %827 = vmatpush1.msra.mxu0 0.0
    %828 = vmatprep.subr.mxu0 0.0
    %829 = vmatpush1.msra.mxu0 0.0
    %830 = vmatprep.subr.mxu0 0.0
    %831 = vmatpush1.msra.mxu0 0.0
    %832 = vmatprep.subr.mxu0 0.0
    %833 = vmatpush1.msra.mxu0 0.0
    %834 = vmatprep.subr.mxu0 0.0
    %835 = vmatpush1.msra.mxu0 0.0
    %836 = vmatprep.subr.mxu0 0.0
    %837 = vmatpush1.msra.mxu0 0.0
    %838 = vmatprep.subr.mxu0 0.0
    %839 = vmatpush1.msra.mxu0 0.0
    %840 = vmatprep.subr.mxu0 0.0
    %841 = vmatpush1.msra.mxu0 0.0
    %842 = vmatprep.subr.mxu0 0.0
    %843 = vmatpush1.msra.mxu0 0.0
    %844 = vmatprep.subr.mxu0 0.0
    %845 = vmatpush1.msra.mxu0 0.0
    %846 = vmatprep.subr.mxu0 0.0
    %847 = vmatpush1.msra.mxu0 0.0
    %848 = vmatprep.mubr.f32.mxu0 0.0
    %849 = vmatmul.mubr.f32.gmra.mrb[0].mxu0 %v782
    %v850 = vpop.f32.mrb[0].mxu0
    %v851 = vadd.f32 0.0, %v850
    %v852 = vpop.f32.mrb[0].mxu0
    %853 = vdwg.mxu0
    %v854 = vmul.f32 %v777, %v194
    %v855 = vsel %vm221, %v854, 0.0
    %856 = vadd.xlane.f32.xlu0 %v855
    %v857 = vpop.xlane.xlu0 %856
    %v858 = vmul.f32 %v199, %v851
    %v859 = vsel %vm221, %v858, 0.0
    %860 = vadd.xlane.f32.xlu0 %v859
    %v861 = vpop.xlane.xlu0 %860
    %v862 = vxor.u32 %v857, 2147483648
    %v863 = vmul.f32 %v862, 1.442695
    %v864 = vpow.pop %v863
    %v865 = vadd.f32 %v864, 1.0
    %v866 = vrcp.pop %v865
    %v867 = vmul.f32 1.0, %v866
    %v868 = vadd.f32 %v867, 1e-08
    %v869 = vlog2.pop %v868
    %v870 = vmul.f32 %v869, 0.6931472
    %v871 = vsub.f32 0.0, %v870
    %v872 = vxor.u32 %v861, 2147483648
    %v873 = vmul.f32 %v872, 1.442695
    %v874 = vpow.pop %v873
    %v875 = vadd.f32 %v874, 1.0
    %v876 = vrcp.pop %v875
    %v877 = vmul.f32 1.0, %v876
    %v878 = vsub.f32 1.0, %v877
    %v879 = vadd.f32 %v878, 1e-08
    %v880 = vlog2.pop %v879
    %v881 = vmul.f32 %v880, 0.6931472
    %v882 = vsub.f32 %v871, %v881
    %vm883 = vcmask 7168
    %v884 = vsel %vm883, %v882, 0.0
    %885 = vadd.xlane.f32.xlu0 %v884
    %v886 = vpop.xlane.xlu0 %885
    %v887 = vrot.slane %v886, 4
    %v888 = vadd.f32 %v886, %v887
    %v889 = vrot.slane %v888, 2
    %v890 = vadd.f32 %v888, %v889
    %v891 = vrot.slane %v890, 1
    %v892 = vadd.f32 %v890, %v891
    %s893 = vtos %v892
    %s894 = scalar_lea.smem [#allocation2], 0
    %895 = sst [smem:[%s894]] %s893
    // Predicated region
    $region14: #{dhcn_forward.1} parent=1 // pred_check
      _
    $region15: #{dhcn_forward.1} parent=1 // pred_check_branch
      %897 = sbr.rel (0) target = $region17
    $region16: #{dhcn_forward.1} parent=1 // pred_region
      _
    $region17: #{dhcn_forward.1} parent=1 // pred_fallthru
      _
    // Predicated region
    $region18: #{dhcn_forward.1} parent=1 // pred_check
      _
    $region19: #{dhcn_forward.1} parent=1 // pred_check_branch
      %899 = sbr.rel (0) target = $region21
    $region20: #{dhcn_forward.1} parent=1 // pred_region
      %s901 = ssub.s32 16, 16
      %902 = vsyncadd [#allocation3], %s901
      %905 = dma.smem_to_hbm [#allocation2], 16, %s4, [#allocation3]
    $region21: #{dhcn_forward.1} parent=1 // pred_fallthru
      _
    // Predicated region
    $region22: #{dhcn_forward.1} parent=1 // pred_check
      _
    $region23: #{dhcn_forward.1} parent=1 // pred_check_branch
      %907 = sbr.rel (0) target = $region25
    $region24: #{dhcn_forward.1} parent=1 // pred_region
      _
    $region25: #{dhcn_forward.1} parent=1 // pred_fallthru
      _
    // Predicated region
    $region26: #{dhcn_forward.1} parent=1 // pred_check
      _
    $region27: #{dhcn_forward.1} parent=1 // pred_check_branch
      %909 = sbr.rel (0) target = $region29
    $region28: #{dhcn_forward.1} parent=1 // pred_region
      %910 = dma.done [#allocation3], 16
    $region29: #{dhcn_forward.1} parent=1 // pred_fallthru
      _
    %911 = sfence
    %912 = vsyncpa [#allocation3], 1

</llo_original>
